<compile_context>
chip_gen: v5e
topology: v5e:2x2
jax: 0.10.0
libtpu: 0.0.40
codegen_flags: <defaults>
</compile_context>

<pallas_src>
import functools

import jax
import jax.numpy as jnp
from jax import lax
from jax.experimental import pallas as pl
from jax.experimental.pallas import tpu as pltpu


# Conservative across v5e/v6e (128 MiB physical VMEM) and v7x (64 MiB per TC).
_SAFE_VMEM_BYTES = 48 << 20


# ---------------------------------------------------------------------------
# Fused single-pass kernel: pool + MLP + scale on whole samples.
# ---------------------------------------------------------------------------
def _cha_fused_kernel(x_ref, w1t_ref, w2t_ref, o_ref):
    # x_ref: (NB, C, HW)  w1t_ref: (C, Ch)  w2t_ref: (Ch, C)  o_ref: (NB, C, HW)
    x = x_ref[...]                                             # native dtype
    nb, _, hw = x.shape

    # f32-accumulated mean; max in the native dtype (upcast only (NB, C)).
    avg_p = jnp.sum(x, axis=-1, dtype=jnp.float32) * (1.0 / hw)   # (NB, C)
    max_p = jnp.max(x, axis=-1).astype(jnp.float32)               # (NB, C)

    # Fused shared MLP over both pooled vectors of every sample in the block.
    p = jnp.concatenate([avg_p, max_p], axis=0)                   # (2*NB, C)
    h = jnp.maximum(
        jnp.dot(p, w1t_ref[...].astype(jnp.float32),
                preferred_element_type=jnp.float32), 0.0)         # (2*NB, Ch)
    y = jnp.dot(h, w2t_ref[...].astype(jnp.float32),
                preferred_element_type=jnp.float32)               # (2*NB, C)

    att = jax.nn.sigmoid(y[:nb] + y[nb:]).astype(x.dtype)         # (NB, C)
    o_ref[...] = x * att[:, :, None]                              # broadcast over HW


# ---------------------------------------------------------------------------
# Two-phase kernels (fallback for samples too large to keep resident).
# ---------------------------------------------------------------------------
def _cha_pool_kernel(x_ref, w1t_ref, w2t_ref, att_ref, sum_acc, max_acc, *, hw_true):
    # Grid: (N, n_hw_chunks); HW chunks are the (last) reduction axis.
    h = pl.program_id(1)
    n_chunks = pl.num_programs(1)

    @pl.when(h == 0)
    def _():
        sum_acc[...] = jnp.zeros_like(sum_acc)
        max_acc[...] = jnp.full_like(max_acc, -jnp.inf)

    x = x_ref[...]                                   # (1, C, hw_chunk), native dtype
    hw_chunk = x.shape[-1]
    rem = hw_true % hw_chunk                         # static
    if rem:
        # Only the last chunk has out-of-bounds (unspecified) lanes.
        lane = lax.broadcasted_iota(jnp.int32, x.shape, 2)
        limit = jnp.where(h == n_chunks - 1, rem, hw_chunk)
        valid = lane < limit
        x_sum = jnp.where(valid, x, 0)
        x_max = jnp.where(valid, x, -jnp.inf)
    else:
        x_sum = x
        x_max = x

    sum_acc[...] += jnp.sum(x_sum, axis=-1, dtype=jnp.float32)            # (1, C)
    max_acc[...] = jnp.maximum(max_acc[...],
                               jnp.max(x_max, axis=-1).astype(jnp.float32))

    @pl.when(h == n_chunks - 1)
    def _():
        avg_p = sum_acc[...] * (1.0 / hw_true)                            # (1, C)
        p = jnp.concatenate([avg_p, max_acc[...]], axis=0)                # (2, C)
        hid = jnp.maximum(
            jnp.dot(p, w1t_ref[...].astype(jnp.float32),
                    preferred_element_type=jnp.float32), 0.0)             # (2, Ch)
        y = jnp.dot(hid, w2t_ref[...].astype(jnp.float32),
                    preferred_element_type=jnp.float32)                   # (2, C)
        att = jax.nn.sigmoid(y[0:1] + y[1:2])                             # (1, C)
        att_ref[...] = att[..., None].astype(att_ref.dtype)               # (1, C, 1)


def _cha_scale_kernel(att_ref, x_ref, o_ref):
    # att_ref: (1, C, 1)  x_ref/o_ref: (1, C, hw_chunk)
    o_ref[...] = x_ref[...] * att_ref[...]


# ---------------------------------------------------------------------------
# Wrapper.
# ---------------------------------------------------------------------------
def _choose_samples_per_block(n, per_sample_bytes, target_bytes):
    """Largest divisor of n whose block fits target; prefer >=2 grid steps."""
    divisors = [d for d in range(1, n + 1) if n % d == 0]
    fits = [d for d in divisors if d * per_sample_bytes <= target_bytes]
    if not fits:
        return 1
    best = max(fits)
    if n > 1:
        multi = [d for d in fits if n // d >= 2]
        if multi:
            best = max(multi)
    return best


def _vmem_budget(block_bytes, block_elems):
    # 2x double-buffered input + 2x output DMA buffers + ~one f32 block
    # temporary (the f32-accumulated reduce / masked copies) + weights/headroom.
    return 4 * block_bytes + 4 * block_elems + (2 << 20)


def channel_attention(x_nchw, w1, w2, *, target_block_bytes=4 << 20,
                      hw_chunk_bytes=2 << 20, force_two_phase=False):
    """x_nchw: (N, C, H, W); w1: (C//r, C); w2: (C, C//r). Returns (N, C, H, W)."""
    N, C, H, W = x_nchw.shape
    HW = H * W
    Ch = w1.shape[0]
    dtype = x_nchw.dtype
    itemsize = jnp.dtype(dtype).itemsize

    x = x_nchw.reshape(N, C, HW)
    w1t = w1.T          # (C, Ch): dots become plain (M,K)x(K,N), no in-kernel transpose
    w2t = w2.T          # (Ch, C)

    per_sample = C * HW * itemsize
    NB = _choose_samples_per_block(N, per_sample, target_block_bytes)
    block_bytes = NB * per_sample
    block_elems = NB * C * HW
    fused_budget = _vmem_budget(block_bytes, block_elems)

    if not force_two_phase and fused_budget <= _SAFE_VMEM_BYTES:
        out = pl.pallas_call(
            _cha_fused_kernel,
            out_shape=jax.ShapeDtypeStruct((N, C, HW), dtype),
            grid_spec=pltpu.PrefetchScalarGridSpec(
                num_scalar_prefetch=0,
                grid=(N // NB,),
                in_specs=[
                    pl.BlockSpec((NB, C, HW), lambda n: (n, 0, 0)),
                    pl.BlockSpec((C, Ch), lambda n: (0, 0)),
                    pl.BlockSpec((Ch, C), lambda n: (0, 0)),
                ],
                out_specs=pl.BlockSpec((NB, C, HW), lambda n: (n, 0, 0)),
            ),
            compiler_params=pltpu.CompilerParams(
                dimension_semantics=("parallel",),
                vmem_limit_bytes=int(max(fused_budget, 16 << 20)),
            ),
        )(x, w1t, w2t)
        return out.reshape(N, C, H, W)

    # ---- Two-phase path: sample too large to keep resident (or forced). ----
    hw_chunk = (hw_chunk_bytes // max(C * itemsize, 1)) // 128 * 128
    hw_chunk = max(hw_chunk, 128)
    if hw_chunk >= HW:
        hw_chunk = HW
    n_chunks = pl.cdiv(HW, hw_chunk)
    chunk_bytes = C * hw_chunk * itemsize
    chunk_elems = C * hw_chunk
    chunk_vmem = int(max(_vmem_budget(chunk_bytes, chunk_elems), 16 << 20))

    # Phase 1: streamed pooling over HW chunks + MLP -> attention (N, C, 1).
    att = pl.pallas_call(
        functools.partial(_cha_pool_kernel, hw_true=HW),
        out_shape=jax.ShapeDtypeStruct((N, C, 1), dtype),
        grid_spec=pltpu.PrefetchScalarGridSpec(
            num_scalar_prefetch=0,
            grid=(N, n_chunks),
            in_specs=[
                pl.BlockSpec((1, C, hw_chunk), lambda n, h: (n, 0, h)),
                pl.BlockSpec((C, Ch), lambda n, h: (0, 0)),
                pl.BlockSpec((Ch, C), lambda n, h: (0, 0)),
            ],
            out_specs=pl.BlockSpec((1, C, 1), lambda n, h: (n, 0, 0)),
            scratch_shapes=[pltpu.VMEM((1, C), jnp.float32),
                            pltpu.VMEM((1, C), jnp.float32)],
        ),
        compiler_params=pltpu.CompilerParams(
            dimension_semantics=("parallel", "arbitrary"),
            vmem_limit_bytes=chunk_vmem,
        ),
    )(x, w1t, w2t)

    # Phase 2: streamed elementwise scale.
    out = pl.pallas_call(
        _cha_scale_kernel,
        out_shape=jax.ShapeDtypeStruct((N, C, HW), dtype),
        grid_spec=pltpu.PrefetchScalarGridSpec(
            num_scalar_prefetch=0,
            grid=(N, n_chunks),
            in_specs=[
                pl.BlockSpec((1, C, 1), lambda n, h: (n, 0, 0)),
                pl.BlockSpec((1, C, hw_chunk), lambda n, h: (n, 0, h)),
            ],
            out_specs=pl.BlockSpec((1, C, hw_chunk), lambda n, h: (n, 0, h)),
        ),
        compiler_params=pltpu.CompilerParams(
            dimension_semantics=("parallel", "parallel"),
            vmem_limit_bytes=chunk_vmem,
        ),
    )(att, x)
    return out.reshape(N, C, H, W)


def channel_attention_ref(x, w1, w2):
    # Pure-JAX reference matching the PyTorch semantics.
    avg_p = jnp.mean(x, axis=(2, 3), keepdims=True)   # (N, C, 1, 1)
    max_p = jnp.max(x, axis=(2, 3), keepdims=True)

    def fc(p):                                        # p: (N, C, 1, 1)
        v = p[:, :, 0, 0]                             # (N, C)
        h = jnp.maximum(v @ w1.T, 0.0)                # (N, Ch)
        return (h @ w2.T)[:, :, None, None]           # (N, C, 1, 1)

    att = jax.nn.sigmoid(fc(avg_p) + fc(max_p))
    return x * att


if __name__ == "__main__":
    # in_planes must be divisible by ratio=16 -> use C=32 (hidden=2).
    N, C, H, W = 2, 32, 16, 16
    ratio = 16
    Ch = C // ratio

    key = jax.random.PRNGKey(0)
    kx, k1, k2, kx2 = jax.random.split(key, 4)
    x = jax.random.normal(kx, (N, C, H, W), dtype=jnp.float32)
    # Conv2d weights are (out, in, 1, 1) in PyTorch; squeeze to (out, in).
    w1 = 0.1 * jax.random.normal(k1, (Ch, C), dtype=jnp.float32)   # fc[0]
    w2 = 0.1 * jax.random.normal(k2, (C, Ch), dtype=jnp.float32)   # fc[2]

    out = jax.block_until_ready(channel_attention(x, w1, w2))
    ref = channel_attention_ref(x, w1, w2)
    assert out.shape == (N, C, H, W)
    assert out.dtype == x.dtype
    assert jnp.allclose(out, ref, atol=1e-5, rtol=1e-5), "fused path mismatch"

    # Non-multiple-of-128 spatial size: no pad / slice HBM passes (fused path),
    # plus the two-phase fallback forced with small chunks (exercises masking).
    x2 = jax.random.normal(kx2, (N, C, 16, 12), dtype=jnp.float32)
    ref2 = channel_attention_ref(x2, w1, w2)
    out2 = jax.block_until_ready(channel_attention(x2, w1, w2))
    assert jnp.allclose(out2, ref2, atol=1e-5, rtol=1e-5), "fused non-128 mismatch"
    out3 = jax.block_until_ready(
        channel_attention(x2, w1, w2, force_two_phase=True, hw_chunk_bytes=16 << 10))
    assert jnp.allclose(out3, ref2, atol=1e-5, rtol=1e-5), "two-phase path mismatch"

    print("KERNEL_OK")
</pallas_src>

<mosaic_0001>
module attributes {stable_mosaic.version = 11 : i64} {
  func.func @_cha_fused_kernel(%arg0: i32, %arg1: memref<1x32x256xf32, #tpu.memory_space<vmem>>, %arg2: memref<32x2xf32, #tpu.memory_space<vmem>>, %arg3: memref<2x32xf32, #tpu.memory_space<vmem>>, %arg4: memref<1x32x256xf32, #tpu.memory_space<vmem>>) attributes {dimension_semantics = [#tpu.dimension_semantics<parallel>], iteration_bounds = array<i64: 2>, scalar_prefetch = 0 : i64, scratch_operands = 0 : i64, tpu.core_type = #tpu.core_type<tc>, window_params = [{transform_indices = @transform_0, window_bounds = array<i64: 1, 32, 256>}, {pipeline_mode = #tpu.pipeline_mode<synchronous>, transform_indices = @transform_1, window_bounds = array<i64: 32, 2>}, {pipeline_mode = #tpu.pipeline_mode<synchronous>, transform_indices = @transform_2, window_bounds = array<i64: 2, 32>}, {transform_indices = @transform_3, window_bounds = array<i64: 1, 32, 256>}]} {
    %c0 = arith.constant 0 : index
    %c0_0 = arith.constant 0 : index
    %c0_1 = arith.constant 0 : index
    %0 = vector.load %arg1[%c0, %c0_0, %c0_1] : memref<1x32x256xf32, #tpu.memory_space<vmem>>, vector<1x32x256xf32>
    %cst = arith.constant dense<0.000000e+00> : vector<1x32xf32>
    %1 = vector.multi_reduction <add>, %0, %cst [2] : vector<1x32x256xf32> to vector<1x32xf32>
    %cst_2 = arith.constant 3.906250e-03 : f32
    %2 = vector.broadcast %cst_2 : f32 to vector<1x32xf32>
    %3 = arith.mulf %1, %2 : vector<1x32xf32>
    %cst_3 = arith.constant dense<0xFF800000> : vector<1x32xf32>
    %4 = vector.multi_reduction <maximumf>, %0, %cst_3 [2] : vector<1x32x256xf32> to vector<1x32xf32>
    %5 = tpu.concatenate %3, %4 in 0 : vector<1x32xf32>, vector<1x32xf32> -> vector<2x32xf32>
    %c0_4 = arith.constant 0 : index
    %c0_5 = arith.constant 0 : index
    %6 = vector.load %arg2[%c0_4, %c0_5] : memref<32x2xf32, #tpu.memory_space<vmem>>, vector<32x2xf32>
    %cst_6 = arith.constant dense<0.000000e+00> : vector<2x2xf32>
    %7 = tpu.matmul %5, %6, %cst_6 {dimension_numbers = #tpu.dot_dimension_numbers<[1], [0], [0], [1], [0, 0, 1, 1], [], []>} : vector<2x32xf32>, vector<32x2xf32>, vector<2x2xf32> -> vector<2x2xf32>
    %cst_7 = arith.constant 0.000000e+00 : f32
    %8 = vector.broadcast %cst_7 : f32 to vector<2x2xf32>
    %9 = arith.maximumf %7, %8 : vector<2x2xf32>
    %c0_8 = arith.constant 0 : index
    %c0_9 = arith.constant 0 : index
    %10 = vector.load %arg3[%c0_8, %c0_9] : memref<2x32xf32, #tpu.memory_space<vmem>>, vector<2x32xf32>
    %cst_10 = arith.constant dense<0.000000e+00> : vector<2x32xf32>
    %11 = tpu.matmul %9, %10, %cst_10 {dimension_numbers = #tpu.dot_dimension_numbers<[1], [0], [0], [1], [0, 0, 1, 1], [], []>} : vector<2x2xf32>, vector<2x32xf32>, vector<2x32xf32> -> vector<2x32xf32>
    %12 = vector.extract_strided_slice %11 {offsets = [0, 0], sizes = [1, 32], strides = [1, 1]} : vector<2x32xf32> to vector<1x32xf32>
    %13 = vector.extract_strided_slice %11 {offsets = [1, 0], sizes = [1, 32], strides = [1, 1]} : vector<2x32xf32> to vector<1x32xf32>
    %14 = arith.addf %12, %13 : vector<1x32xf32>
    %15 = arith.negf %14 : vector<1x32xf32>
    %16 = math.exp %15 : vector<1x32xf32>
    %cst_11 = arith.constant 1.000000e+00 : f32
    %17 = vector.broadcast %cst_11 : f32 to vector<1x32xf32>
    %18 = arith.addf %17, %16 : vector<1x32xf32>
    %19 = arith.divf %17, %18 : vector<1x32xf32>
    %20 = vector.shape_cast %19 : vector<1x32xf32> to vector<1x32x1xf32>
    %21 = vector.broadcast %20 : vector<1x32x1xf32> to vector<1x32x256xf32>
    %22 = arith.mulf %0, %21 : vector<1x32x256xf32>
    %c0_12 = arith.constant 0 : index
    %c0_13 = arith.constant 0 : index
    %c0_14 = arith.constant 0 : index
    %23 = vector.load %arg4[%c0_12, %c0_13, %c0_14] : memref<1x32x256xf32, #tpu.memory_space<vmem>>, vector<1x32x256xf32>
    tpu.vector_store %arg4[%c0_12, %c0_13, %c0_14], %22 {strides = array<i32>} : memref<1x32x256xf32, #tpu.memory_space<vmem>>, vector<1x32x256xf32>,
    return
  }
  func.func @transform_0(%arg0: i32) -> (i32, i32, i32) {
    %c0_i32 = arith.constant 0 : i32
    %c0_i32_0 = arith.constant 0 : i32
    %c0_i32_1 = arith.constant 0 : i32
    return %arg0, %c0_i32, %c0_i32_0 : i32, i32, i32
  }
  func.func @transform_1(%arg0: i32) -> (i32, i32) {
    %c0_i32 = arith.constant 0 : i32
    %c0_i32_0 = arith.constant 0 : i32
    %c0_i32_1 = arith.constant 0 : i32
    return %c0_i32, %c0_i32_0 : i32, i32
  }
  func.func @transform_2(%arg0: i32) -> (i32, i32) {
    %c0_i32 = arith.constant 0 : i32
    %c0_i32_0 = arith.constant 0 : i32
    %c0_i32_1 = arith.constant 0 : i32
    return %c0_i32, %c0_i32_0 : i32, i32
  }
  func.func @transform_3(%arg0: i32) -> (i32, i32, i32) {
    %c0_i32 = arith.constant 0 : i32
    %c0_i32_0 = arith.constant 0 : i32
    %c0_i32_1 = arith.constant 0 : i32
    return %arg0, %c0_i32, %c0_i32_0 : i32, i32, i32
  }
}

</mosaic_0001>

<llo_original>
// kernel: tpu_custom_call.1
$region0: #{tpu_custom_call.1}
  #allocation0 [shape = 'u32[]', space=smem, size = 0x4, offset = 0x4, fixed_abs, tag = 'smem constant byte address 0x4 - core index']
  #allocation1 [shape = 'u32[72,128]{1,0:T(1,128)}', space=vmem, size = 0x9000, scoped, tag = 'internal scratch']
  %s0 = inlined_call_operand.hbm [shape: f32[2,32,256], index: 0, kind: input, shape index: {}]
  %s1 = inlined_call_operand.vmem [shape: f32[32,2], index: 1, kind: input, shape index: {}]
  %s2 = inlined_call_operand.vmem [shape: f32[2,32], index: 2, kind: input, shape index: {}]
  %s3 = inlined_call_operand.hbm [shape: f32[2,32,256], index: 3, kind: output, shape index: {}]
  %s4 = sld [smem:[#allocation0]]
  $region49: #{tpu_custom_call.1} parent=0
    _
  %s6 = ssub.s32 1, %s4
  %s7 = scalar_select 0, %s6, %s4
  $region1: #{tpu_custom_call.1} parent=0
    #allocation2 [shape = 'u8[65536]{0}', space=vmem, size = 0x10000, scoped, tag = 'input window, operand 0']
    #allocation3 [shape = 's32[2]{0}', space=sflag, size = 0x8, scoped, tag = 'scoped memory for tpu_custom_call.1']
    #allocation4 [shape = 's32[2]{0}', space=sflag, size = 0x8, scoped, tag = 'scoped memory for tpu_custom_call.1']
    #allocation5 [shape = 'u8[65536]{0}', space=vmem, size = 0x10000, scoped, tag = 'output window, operand 0']
    %8 = vsyncpa [#allocation3], 0
    %s9 = scalar_lea.sflag [#allocation3], 1
    %10 = vsyncpa %s9, 0
    %11 = vsyncpa [#allocation4], 0
    %s12 = scalar_lea.sflag [#allocation4], 1
    %13 = vsyncpa %s12, 0
    loop: start=0, step=1, limit=4
    $region2: #{tpu_custom_call.1} parent=1 // loop_pre_header
      _
    $region3: #{tpu_custom_call.1} parent=1 // loop_header
      %s15 = sphi 0, %s19
      %p16 = scmp.ge.s32.totalorder %s15, 4
      %s25 = sphi 0, %s27
      %s28 = sphi 0, %s25
      %s29 = sphi 0, %s28
      %s45 = sphi 0, %s29
      %s49 = sphi 0, %s49
      %s51 = sphi 0, %s49
      %s52 = sphi 0, %s51
      %s66 = sphi 0, %s52
      %s70 = sphi 0, %s70
      %s72 = sphi 0, %s70
      %s73 = sphi 0, %s72
      %s87 = sphi 0, %s73
      %s93 = sphi 0, %s95
      %s96 = sphi 0, %s93
      %s97 = sphi 0, %s96
      %s113 = sphi 0, %s97
    $region4: #{tpu_custom_call.1} parent=1 // loop_header_branch
      %18 = sbr.rel (%p16) target = $region8
    $region5: #{tpu_custom_call.1} parent=1 // loop_body
      %s20 = ssub.s32 %s15, 1
      %s21 = ssub.s32 %s15, 2
      %s22 = sadd.s32 %s15, 1
      %s23 = ssub.s32 %s15, %s22
      %p24 = scmp.eq.s32.totalorder %s23, 0
      %s26 = sadd.s32 %s25, 1
      %s27 = scalar_select %p24, %s25, %s26
      %p30 = pneg %p24
      %p31 = scmp.eq.s32.totalorder %s15, 1
      %p32 = por %p30, %p31
      %p33 = scmp.ne.s32.totalorder %s25, %s28
      %p34 = scmp.eq.s32.totalorder %s15, 0
      %p35 = por %p33, %p34
      %p36 = scmp.ne.s32.totalorder %s25, %s28
      %p37 = scmp.eq.s32.totalorder %s20, 1
      %p38 = por %p36, %p37
      %p39 = scmp.ne.s32.totalorder %s28, %s29
      %p40 = scmp.eq.s32.totalorder %s20, 0
      %p41 = por %p39, %p40
      %p42 = scmp.ne.s32.totalorder %s28, %s29
      %p43 = scmp.eq.s32.totalorder %s21, 1
      %p44 = por %p42, %p43
      %p46 = scmp.ne.s32.totalorder %s29, %s45
      %p47 = scmp.eq.s32.totalorder %s21, 0
      %p48 = por %p46, %p47
      %s50 = sadd.s32 %s49, 1
      %p53 = scmp.eq.s32.totalorder %s15, 1
      %p54 = scmp.ne.s32.totalorder %s49, %s51
      %p55 = scmp.eq.s32.totalorder %s15, 0
      %p56 = por %p54, %p55
      %p57 = scmp.ne.s32.totalorder %s49, %s51
      %p58 = scmp.eq.s32.totalorder %s20, 1
      %p59 = por %p57, %p58
      %p60 = scmp.ne.s32.totalorder %s51, %s52
      %p61 = scmp.eq.s32.totalorder %s20, 0
      %p62 = por %p60, %p61
      %p63 = scmp.ne.s32.totalorder %s51, %s52
      %p64 = scmp.eq.s32.totalorder %s21, 1
      %p65 = por %p63, %p64
      %p67 = scmp.ne.s32.totalorder %s52, %s66
      %p68 = scmp.eq.s32.totalorder %s21, 0
      %p69 = por %p67, %p68
      %s71 = sadd.s32 %s70, 1
      %p74 = scmp.eq.s32.totalorder %s15, 1
      %p75 = scmp.ne.s32.totalorder %s70, %s72
      %p76 = scmp.eq.s32.totalorder %s15, 0
      %p77 = por %p75, %p76
      %p78 = scmp.ne.s32.totalorder %s70, %s72
      %p79 = scmp.eq.s32.totalorder %s20, 1
      %p80 = por %p78, %p79
      %p81 = scmp.ne.s32.totalorder %s72, %s73
      %p82 = scmp.eq.s32.totalorder %s20, 0
      %p83 = por %p81, %p82
      %p84 = scmp.ne.s32.totalorder %s72, %s73
      %p85 = scmp.eq.s32.totalorder %s21, 1
      %p86 = por %p84, %p85
      %p88 = scmp.ne.s32.totalorder %s73, %s87
      %p89 = scmp.eq.s32.totalorder %s21, 0
      %p90 = por %p88, %p89
      %s91 = ssub.s32 %s15, %s22
      %p92 = scmp.eq.s32.totalorder %s91, 0
      %s94 = sadd.s32 %s93, 1
      %s95 = scalar_select %p92, %s93, %s94
      %p98 = pneg %p92
      %p99 = scmp.eq.s32.totalorder %s15, 1
      %p100 = por %p98, %p99
      %p101 = scmp.ne.s32.totalorder %s93, %s96
      %p102 = scmp.eq.s32.totalorder %s15, 0
      %p103 = por %p101, %p102
      %p104 = scmp.ne.s32.totalorder %s93, %s96
      %p105 = scmp.eq.s32.totalorder %s20, 1
      %p106 = por %p104, %p105
      %p107 = scmp.ne.s32.totalorder %s96, %s97
      %p108 = scmp.eq.s32.totalorder %s20, 0
      %p109 = por %p107, %p108
      %p110 = scmp.ne.s32.totalorder %s96, %s97
      %p111 = scmp.eq.s32.totalorder %s21, 1
      %p112 = por %p110, %p111
      %p114 = scmp.ne.s32.totalorder %s97, %s113
      %p115 = scmp.eq.s32.totalorder %s21, 0
      %p116 = por %p114, %p115
      %p117 = scmp.le.s32.totalorder 1, %s15
      %p118 = scmp.lt.s32.totalorder %s15, 3
      %p119 = pnand %p117, %p118
      %p120 = pneg %p119
      // Predicated region
      $region9: #{tpu_custom_call.1} parent=5 // pred_check
        _
      $region10: #{tpu_custom_call.1} parent=5 // pred_check_branch
        %122 = sbr.rel (%p119) target = $region12
      $region11: #{tpu_custom_call.1} parent=5 // pred_region
        %s123 = ssub.s32 %s15, 1
        // Predicated region
        $region13: #{tpu_custom_call.1} parent=11 // pred_check
          %p124 = pneg %p62
        $region14: #{tpu_custom_call.1} parent=11 // pred_check_branch
          %126 = sbr.rel (%p124) target = $region16
        $region15: #{tpu_custom_call.1} parent=11 // pred_region
          _
        $region16: #{tpu_custom_call.1} parent=11 // pred_fallthru
          _
        // Predicated region
        $region17: #{tpu_custom_call.1} parent=11 // pred_check
          %p127 = pneg %p83
        $region18: #{tpu_custom_call.1} parent=11 // pred_check_branch
          %129 = sbr.rel (%p127) target = $region20
        $region19: #{tpu_custom_call.1} parent=11 // pred_region
          _
        $region20: #{tpu_custom_call.1} parent=11 // pred_fallthru
          _
      $region12: #{tpu_custom_call.1} parent=5 // pred_fallthru
        _
      %p130 = scmp.lt.s32.totalorder %s15, 2
      // Predicated region
      $region21: #{tpu_custom_call.1} parent=5 // pred_check
        %p131 = pneg %p130
      $region22: #{tpu_custom_call.1} parent=5 // pred_check_branch
        %133 = sbr.rel (%p131) target = $region24
      $region23: #{tpu_custom_call.1} parent=5 // pred_region
        // Predicated region
        $region25: #{tpu_custom_call.1} parent=23 // pred_check
          %p134 = pneg %p35
        $region26: #{tpu_custom_call.1} parent=23 // pred_check_branch
          %136 = sbr.rel (%p134) target = $region28
        $region27: #{tpu_custom_call.1} parent=23 // pred_region
          %s137 = sand.u32 %s25, 1
          %s138 = scalar_lea.sflag [#allocation3], %s137
          %s139 = sand.u32 %s25, 1
          %s140 = smul.addr %s139, 64
          %s141 = scalar_lea.vmem [#allocation2], %s140
          %143 = vsyncadd %s138, 0
          %s144 = smul.addr %s15, 8
          %s145 = smul.addr %s144, 8
          %s146 = scalar_lea.hbm %s0, %s145
          %s147 = sshll.u32 %s146, 4
          %s148 = int_to_ptr.hbm [resolvable:$true] %s147
          %s149 = sshll.u32 %s141, 4
          %s150 = int_to_ptr.vmem [resolvable:$true] %s149
          %155 = dma.hbm_to_vmem [thread:$0]  %s148, 1024, %s150, %s138, 256, 256, 16
        $region28: #{tpu_custom_call.1} parent=23 // pred_fallthru
          _
      $region24: #{tpu_custom_call.1} parent=5 // pred_fallthru
        _
      %p156 = scmp.le.s32.totalorder 1, %s15
      %p157 = scmp.lt.s32.totalorder %s15, 3
      %p158 = pnand %p156, %p157
      %p159 = pneg %p158
      // Predicated region
      $region29: #{tpu_custom_call.1} parent=5 // pred_check
        _
      $region30: #{tpu_custom_call.1} parent=5 // pred_check_branch
        %161 = sbr.rel (%p158) target = $region32
      $region31: #{tpu_custom_call.1} parent=5 // pred_region
        %s162 = ssub.s32 %s15, 1
        %s163 = sand.u32 %s28, 1
        %s164 = scalar_lea.sflag [#allocation3], %s163
        %s165 = sand.u32 %s28, 1
        %s166 = smul.addr %s165, 64
        %s167 = scalar_lea.vmem [#allocation2], %s166
        // Predicated region
        $region33: #{tpu_custom_call.1} parent=31 // pred_check
          %p168 = pneg %p41
        $region34: #{tpu_custom_call.1} parent=31 // pred_check_branch
          %170 = sbr.rel (%p168) target = $region36
        $region35: #{tpu_custom_call.1} parent=31 // pred_region
          %172 = dma.done %s164, 1024
        $region36: #{tpu_custom_call.1} parent=31 // pred_fallthru
          _
        %s173 = sand.u32 %s28, 1
        %s174 = scalar_lea.sflag [#allocation3], %s173
        %s175 = sand.u32 %s28, 1
        %s176 = smul.addr %s175, 64
        %s177 = scalar_lea.vmem [#allocation2], %s176
        %p178 = pneg %p41
        %p179 = pneg %p38
        %p180 = pneg %p62
        %p181 = pneg %p59
        %p182 = pneg %p83
        %p183 = pneg %p80
        %p184 = pneg %p109
        %p185 = pneg %p106
        %s186 = sand.u32 %s96, 1
        %s187 = scalar_lea.sflag [#allocation4], %s186
        %s188 = sand.u32 %s96, 1
        %s189 = smul.addr %s188, 64
        %s190 = scalar_lea.vmem [#allocation5], %s189
        %v191 = vld [vmem:[%s167] sm:$0xff]
        %v192 = vld [vmem:[%s167 + $0x8] sm:$0xff]
        %v193 = vld [vmem:[%s167 + $0x10] sm:$0xff]
        %v194 = vld [vmem:[%s167 + $0x18] sm:$0xff]
        %v195 = vld [vmem:[%s167 + $0x20] sm:$0xff]
        %v196 = vld [vmem:[%s167 + $0x28] sm:$0xff]
        %v197 = vld [vmem:[%s167 + $0x30] sm:$0xff]
        %v198 = vld [vmem:[%s167 + $0x38] sm:$0xff]
        %v199 = vadd.f32 %v191, %v192
        %200 = vadd.xlane.f32.xlu0 %v199
        %v201 = vpop.xlane.xlu0 %200
        %v202 = vadd.f32 %v193, %v194
        %203 = vadd.xlane.f32.xlu0 %v202
        %v204 = vpop.xlane.xlu0 %203
        %v205 = vadd.f32 %v195, %v196
        %206 = vadd.xlane.f32.xlu0 %v205
        %v207 = vpop.xlane.xlu0 %206
        %v208 = vadd.f32 %v197, %v198
        %209 = vadd.xlane.f32.xlu0 %v208
        %v210 = vpop.xlane.xlu0 %209
        %v211 = vmul.f32 %v201, 0.00390625
        %v212 = vmul.f32 %v204, 0.00390625
        %v213 = vmul.f32 %v207, 0.00390625
        %v214 = vmul.f32 %v210, 0.00390625
        %v215 = vmax.f32 %v191, %v192
        %216 = vmax.xlane.f32.xlu0 %v215
        %v217 = vpop.xlane.xlu0 %216
        %v218 = vmax.f32 %v193, %v194
        %219 = vmax.xlane.f32.xlu0 %v218
        %v220 = vpop.xlane.xlu0 %219
        %v221 = vmax.f32 %v195, %v196
        %222 = vmax.xlane.f32.xlu0 %v221
        %v223 = vpop.xlane.xlu0 %222
        %v224 = vmax.f32 %v197, %v198
        %225 = vmax.xlane.f32.xlu0 %v224
        %v226 = vpop.xlane.xlu0 %225
        %v231 = vlaneseq
        %v232 = vand.u32 %v231, 127
        %v233 = vperm.slane %v211, %v232
        %v234 = vadd.s32 %v232, 4294967288
        %v235 = vperm.slane %v212, %v234
        %vm236 = vcmask 130112
        %v237 = vsel %vm236, %v235, %v233
        %v238 = vadd.s32 %v232, 4294967280
        %v239 = vperm.slane %v213, %v238
        %vm240 = vcmask 195712
        %v241 = vsel %vm240, %v239, %v237
        %v242 = vadd.s32 %v232, 4294967272
        %v243 = vperm.slane %v214, %v242
        %vm244 = vcmask 261312
        %v245 = vsel %vm244, %v243, %v241
        %v251 = vperm.slane %v217, %v232
        %v252 = vperm.slane %v220, %v234
        %v253 = vsel %vm236, %v252, %v251
        %v254 = vperm.slane %v223, %v238
        %v255 = vsel %vm240, %v254, %v253
        %v256 = vperm.slane %v226, %v242
        %v257 = vsel %vm244, %v256, %v255
        %vm259 = vcmask 1040384
        %v260 = vsel %vm259, %v245, %v257
        %v261 = vld [vmem:[%s1] sm:$0xff]
        %v262 = vld [vmem:[%s1 + $0x8] sm:$0xff]
        %v263 = vld [vmem:[%s1 + $0x10] sm:$0xff]
        %v264 = vld [vmem:[%s1 + $0x18] sm:$0xff]
        %vm265 = vcmask 261120
        %v267 = vsel %vm265, %v260, 0
        %269 = vmatpush.msra.mxu0 0.0
        %270 = vmatpush.msra.mxu0 0.0
        %271 = vmatpush.msra.mxu0 0.0
        %272 = vmatpush.msra.mxu0 0.0
        %273 = vmatpush.msra.mxu0 0.0
        %274 = vmatpush.msra.mxu0 0.0
        %275 = vmatpush.msra.mxu0 0.0
        %276 = vmatpush.msra.mxu0 0.0
        %277 = vmatpush.msra.mxu0 0.0
        %278 = vmatpush.msra.mxu0 0.0
        %279 = vmatpush.msra.mxu0 0.0
        %280 = vmatpush.msra.mxu0 0.0
        %281 = vmatpush.msra.mxu0 %v264
        %282 = vmatpush.msra.mxu0 %v263
        %283 = vmatpush.msra.mxu0 %v262
        %284 = vmatpush.msra.mxu0 %v261
        %285 = vmatmul.f32.gmra.mxu0 %v267
        %v286 = vpop.f32.mrf.mxu0
        %v287 = vadd.f32 0.0, %v286
        %288 = vdwg.mxu0
        %v289 = vmax.f32 %v287, 0.0
        %v290 = vld [vmem:[%s2] sm:$0x3]
        %vm291 = vcmask 15360
        %v293 = vsel %vm291, %v289, 0
        %vm295 = vcmask 1041408
        %v297 = vsel %vm295, %v290, 0
        %299 = vmatpush.msra.mxu0 0.0
        %300 = vmatpush.msra.mxu0 0.0
        %301 = vmatpush.msra.mxu0 0.0
        %302 = vmatpush.msra.mxu0 0.0
        %303 = vmatpush.msra.mxu0 0.0
        %304 = vmatpush.msra.mxu0 0.0
        %305 = vmatpush.msra.mxu0 0.0
        %306 = vmatpush.msra.mxu0 0.0
        %307 = vmatpush.msra.mxu0 0.0
        %308 = vmatpush.msra.mxu0 0.0
        %309 = vmatpush.msra.mxu0 0.0
        %310 = vmatpush.msra.mxu0 0.0
        %311 = vmatpush.msra.mxu0 0.0
        %312 = vmatpush.msra.mxu0 0.0
        %313 = vmatpush.msra.mxu0 0.0
        %314 = vmatpush.msra.mxu0 %v297
        %315 = vmatmul.f32.gmra.mxu0 %v293
        %v316 = vpop.f32.mrf.mxu0
        %v317 = vadd.f32 0.0, %v316
        %318 = vdwg.mxu0
        %v320 = vrot.slane %v317, 1
        %v322 = vadd.f32 %v317, %v320
        %v323 = vxor.u32 %v322, 2147483648
        %v324 = vmul.f32 %v323, 1.442695
        %v325 = vpow.pop %v324
        %v326 = vadd.f32 %v325, 1.0
        %v327 = vrcp.pop %v326
        %v328 = vmul.f32 %v326, %v327
        %v329 = vsub.f32 1.0, %v328
        %v330 = vmul.f32 %v327, %v329
        %v331 = vadd.f32 %v327, %v330
        %vm332 = vweird.f32 %v326
        %vm333 = vweird.f32 %v327
        %vm334 = vmor %vm332, %vm333
        %v335 = vsel %vm334, %v327, %v331
        %v336 = vand.u32 2147483647, %v326
        %vm337 = vcmp.eq.f32.partialorder %v336, 8.507059e+37
        %v338 = vand.u32 %v326, 2147483648
        %v339 = vor.u32 1.1754944e-38, %v338
        %v340 = vsel %vm337, %v339, %v335
        %v341 = vmul.f32 1.0, %v340
        %v342 = vperm.slane %v341, 0
        %v343 = vlaneseq
        %v344 = vshrl.u32 %v343, 7
        %346 = vset.pattern.permute.xlu0 %v344
        %347 = vperm.xlu0 %346, %v342
        %v348 = vpop.permute.xlu0 %347
        %v349 = vlaneseq
        %v350 = vshrl.u32 %v349, 7
        %v351 = vadd.s32 %v350, 8
        %352 = vset.pattern.permute.xlu0 %v351
        %353 = vperm.xlu0 %352, %v342
        %v354 = vpop.permute.xlu0 %353
        %v355 = vlaneseq
        %v356 = vshrl.u32 %v355, 7
        %v357 = vadd.s32 %v356, 16
        %358 = vset.pattern.permute.xlu0 %v357
        %359 = vperm.xlu0 %358, %v342
        %v360 = vpop.permute.xlu0 %359
        %v361 = vlaneseq
        %v362 = vshrl.u32 %v361, 7
        %v363 = vadd.s32 %v362, 24
        %364 = vset.pattern.permute.xlu0 %v363
        %365 = vperm.xlu0 %364, %v342
        %v366 = vpop.permute.xlu0 %365
        %v367 = vmul.f32 %v191, %v348
        %v368 = vmul.f32 %v192, %v348
        %v369 = vmul.f32 %v193, %v354
        %v370 = vmul.f32 %v194, %v354
        %v371 = vmul.f32 %v195, %v360
        %v372 = vmul.f32 %v196, %v360
        %v373 = vmul.f32 %v197, %v366
        %v374 = vmul.f32 %v198, %v366
        %375 = vst [vmem:[%s190] sm:$0xff] %v367
        %376 = vst [vmem:[%s190 + $0x8] sm:$0xff] %v368
        %377 = vst [vmem:[%s190 + $0x10] sm:$0xff] %v369
        %378 = vst [vmem:[%s190 + $0x18] sm:$0xff] %v370
        %379 = vst [vmem:[%s190 + $0x20] sm:$0xff] %v371
        %380 = vst [vmem:[%s190 + $0x28] sm:$0xff] %v372
        %381 = vst [vmem:[%s190 + $0x30] sm:$0xff] %v373
        %382 = vst [vmem:[%s190 + $0x38] sm:$0xff] %v374
        %s383 = sand.u32 %s96, 1
        %s384 = scalar_lea.sflag [#allocation4], %s383
        %s385 = sand.u32 %s96, 1
        %s386 = smul.addr %s385, 64
        %s387 = scalar_lea.vmem [#allocation5], %s386
        // Predicated region
        $region37: #{tpu_custom_call.1} parent=31 // pred_check
          %p388 = pneg %p106
        $region38: #{tpu_custom_call.1} parent=31 // pred_check_branch
          %390 = sbr.rel (%p388) target = $region40
        $region39: #{tpu_custom_call.1} parent=31 // pred_region
          %392 = vsyncadd %s384, 0
          %s393 = smul.addr %s20, 8
          %s394 = smul.addr %s393, 8
          %s395 = scalar_lea.hbm %s3, %s394
          %s396 = sshll.u32 %s387, 4
          %s397 = int_to_ptr.vmem [resolvable:$true] %s396
          %s398 = sshll.u32 %s395, 4
          %s399 = int_to_ptr.hbm [resolvable:$true] %s398
          %404 = dma.vmem_to_hbm [thread:$0]  %s397, 1024, %s399, %s384, 256, 256, 16
        $region40: #{tpu_custom_call.1} parent=31 // pred_fallthru
          _
      $region32: #{tpu_custom_call.1} parent=5 // pred_fallthru
        _
      %p405 = scmp.le.s32.totalorder 2, %s15
      // Predicated region
      $region41: #{tpu_custom_call.1} parent=5 // pred_check
        %p406 = pneg %p405
      $region42: #{tpu_custom_call.1} parent=5 // pred_check_branch
        %408 = sbr.rel (%p406) target = $region44
      $region43: #{tpu_custom_call.1} parent=5 // pred_region
        %s409 = ssub.s32 %s15, 2
        // Predicated region
        $region45: #{tpu_custom_call.1} parent=43 // pred_check
          %p410 = pneg %p112
        $region46: #{tpu_custom_call.1} parent=43 // pred_check_branch
          %412 = sbr.rel (%p410) target = $region48
        $region47: #{tpu_custom_call.1} parent=43 // pred_region
          %s413 = sand.u32 %s97, 1
          %s414 = scalar_lea.sflag [#allocation4], %s413
          %s415 = sand.u32 %s97, 1
          %s416 = smul.addr %s415, 64
          %s417 = scalar_lea.vmem [#allocation5], %s416
          %419 = dma.done %s414, 1024
        $region48: #{tpu_custom_call.1} parent=43 // pred_fallthru
          _
      $region44: #{tpu_custom_call.1} parent=5 // pred_fallthru
        _
    $region6: #{tpu_custom_call.1} parent=1 // loop_footer
      %s19 = sadd.s32 1, %s15
    $region7: #{tpu_custom_call.1} parent=1 // loop_footer_branch
      %14 = sbr.rel target = $region3
    $region8: #{tpu_custom_call.1} parent=1 // loop_exit
      _
    %420 = vsyncpa [#allocation3], 1
    %s421 = scalar_lea.sflag [#allocation3], 1
    %422 = vsyncpa %s421, 1
    %423 = vsyncpa [#allocation4], 1
    %s424 = scalar_lea.sflag [#allocation4], 1
    %425 = vsyncpa %s424, 1

</llo_original>
